<compile_context>
chip_gen: v6e
topology: v6e:2x2x1
jax: 0.10.0
libtpu: 0.0.40
codegen_flags: <defaults>
</compile_context>

<pallas_src>
import jax
import jax.numpy as jnp
import numpy as np
from jax.experimental import pallas as pl
from jax.experimental.pallas import tpu as pltpu


def _conv_gemm_kernel(a_ref, w_ref, b_ref, o_ref):
    """One M-tile of the conv-as-GEMM.

    a_ref: (tm, K)      bf16 im2col rows (K = 9 * Cin)
    w_ref: (K, Coutp)   bf16 flattened conv weights (lane-padded Cout)
    b_ref: (1, Coutp)   f32 bias
    o_ref: (tm, Coutp)  output tile
    """
    acc = jnp.dot(a_ref[...], w_ref[...], preferred_element_type=jnp.float32)
    o_ref[...] = (acc + b_ref[...]).astype(o_ref.dtype)


def downsample_conv(x_nchw, weight_oihw, bias, *, tm=256,
                    compute_dtype=jnp.bfloat16):
    """Conv2d(C, C, kernel_size=3, stride=2, padding=1) on NCHW input."""
    N, C, H, W = x_nchw.shape
    Cout, Cin, Kh, Kw = weight_oihw.shape
    assert (Kh, Kw) == (3, 3) and Cin == C
    Ho = (H + 2 - 3) // 2 + 1
    Wo = (W + 2 - 3) // 2 + 1
    M = N * Ho * Wo
    K = 9 * Cin

    # ---- layout glue (plain JAX): im2col in bf16 ----
    x = jnp.transpose(x_nchw, (0, 2, 3, 1)).astype(compute_dtype)     # NHWC
    xp = jnp.pad(x, ((0, 0), (1, 1), (1, 1), (0, 0)))                 # (N,H+2,W+2,C)
    taps = [xp[:, kh:kh + 2 * Ho:2, kw:kw + 2 * Wo:2, :]
            for kh in range(3) for kw in range(3)]                    # 9 x (N,Ho,Wo,C)
    lhs = jnp.stack(taps, axis=3).reshape(M, K)                       # (M, 9*Cin)

    # Weights (Cout, Cin, 3, 3) -> (Kh, Kw, Cin, Cout) -> (9*Cin, Coutp),
    # Coutp lane-aligned to 128 so output stores are unmasked / lane-dense.
    Coutp = max(128, pl.cdiv(Cout, 128) * 128)
    w = jnp.transpose(weight_oihw, (2, 3, 1, 0)).reshape(K, Cout)
    w = jnp.pad(w, ((0, 0), (0, Coutp - Cout))).astype(compute_dtype)
    b2 = jnp.pad(bias, (0, Coutp - Cout)).astype(jnp.float32).reshape(1, Coutp)

    # ---- M tiling: multiple of 8, no larger than M (rounded up to 8) ----
    tm_eff = int(min(tm, pl.cdiv(M, 8) * 8))
    Mp = pl.cdiv(M, tm_eff) * tm_eff
    if Mp != M:
        lhs = jnp.pad(lhs, ((0, Mp - M), (0, 0)))

    out_dtype = x_nchw.dtype
    cd_bytes = jnp.dtype(compute_dtype).itemsize
    out_bytes = jnp.dtype(out_dtype).itemsize
    # double-buffered lhs / weights / bias / out tiles
    est = (2 * tm_eff * K * cd_bytes + 2 * K * Coutp * cd_bytes
           + 2 * Coutp * 4 + 2 * tm_eff * Coutp * out_bytes)
    vmem_limit = int(min(max(2 * est + (4 << 20), 16 << 20), 48 << 20))

    out = pl.pallas_call(
        _conv_gemm_kernel,
        out_shape=jax.ShapeDtypeStruct((Mp, Coutp), out_dtype),
        grid=(Mp // tm_eff,),
        in_specs=[
            pl.BlockSpec((tm_eff, K), lambda i: (i, 0)),
            pl.BlockSpec((K, Coutp), lambda i: (0, 0)),
            pl.BlockSpec((1, Coutp), lambda i: (0, 0)),
        ],
        out_specs=pl.BlockSpec((tm_eff, Coutp), lambda i: (i, 0)),
        compiler_params=pltpu.CompilerParams(
            dimension_semantics=("parallel",),
            vmem_limit_bytes=vmem_limit),
    )(lhs, w, b2)

    out = out[:M, :Cout].reshape(N, Ho, Wo, Cout)
    return jnp.transpose(out, (0, 3, 1, 2))                           # NCHW


if __name__ == "__main__":
    key = jax.random.PRNGKey(0)
    kx, kw, kb = jax.random.split(key, 3)

    N, C, H, W = 2, 4, 16, 16
    x = jax.random.normal(kx, (N, C, H, W), dtype=jnp.float32)

    # Deterministic Conv2d-style init (kaiming-uniform-like bounds).
    fan_in = C * 3 * 3
    bound = 1.0 / np.sqrt(fan_in)
    weight = jax.random.uniform(kw, (C, C, 3, 3), jnp.float32, -bound, bound)
    bias = jax.random.uniform(kb, (C,), jnp.float32, -bound, bound)

    fwd = jax.jit(downsample_conv)
    y = jax.block_until_ready(fwd(x, weight, bias))

    # Reference: XLA conv (same semantics as nn.Conv2d stride=2 pad=1).
    ref = jax.lax.conv_general_dilated(
        x, weight, window_strides=(2, 2), padding=((1, 1), (1, 1)),
        dimension_numbers=("NCHW", "OIHW", "NCHW")) + bias[None, :, None, None]

    assert y.shape == (N, C, H // 2, W // 2), y.shape
    # bf16 MXU operands -> tolerance appropriate for bf16 compute.
    err = float(np.max(np.abs(np.asarray(y) - np.asarray(ref))))
    assert np.allclose(np.asarray(y), np.asarray(ref), atol=5e-2, rtol=5e-2), err
    print("KERNEL_OK")
</pallas_src>

<mosaic_0001>
module attributes {stable_mosaic.version = 11 : i64} {
  func.func @_conv_gemm_kernel(%arg0: i32, %arg1: memref<128x36xbf16, #tpu.memory_space<vmem>>, %arg2: memref<36x128xbf16, #tpu.memory_space<vmem>>, %arg3: memref<1x128xf32, #tpu.memory_space<vmem>>, %arg4: memref<128x128xf32, #tpu.memory_space<vmem>>) attributes {dimension_semantics = [#tpu.dimension_semantics<parallel>], iteration_bounds = array<i64: 1>, scalar_prefetch = 0 : i64, scratch_operands = 0 : i64, tpu.core_type = #tpu.core_type<tc>, window_params = [{transform_indices = @transform_0, window_bounds = array<i64: 128, 36>}, {pipeline_mode = #tpu.pipeline_mode<synchronous>, transform_indices = @transform_1, window_bounds = array<i64: 36, 128>}, {pipeline_mode = #tpu.pipeline_mode<synchronous>, transform_indices = @transform_2, window_bounds = array<i64: 1, 128>}, {transform_indices = @transform_3, window_bounds = array<i64: 128, 128>}]} {
    %c0 = arith.constant 0 : index
    %c0_0 = arith.constant 0 : index
    %0 = vector.load %arg1[%c0, %c0_0] : memref<128x36xbf16, #tpu.memory_space<vmem>>, vector<128x36xbf16>
    %c0_1 = arith.constant 0 : index
    %c0_2 = arith.constant 0 : index
    %1 = vector.load %arg2[%c0_1, %c0_2] : memref<36x128xbf16, #tpu.memory_space<vmem>>, vector<36x128xbf16>
    %cst = arith.constant dense<0.000000e+00> : vector<128x128xf32>
    %2 = tpu.matmul %0, %1, %cst {dimension_numbers = #tpu.dot_dimension_numbers<[1], [0], [0], [1], [0, 0, 1, 1], [], []>} : vector<128x36xbf16>, vector<36x128xbf16>, vector<128x128xf32> -> vector<128x128xf32>
    %c0_3 = arith.constant 0 : index
    %c0_4 = arith.constant 0 : index
    %3 = vector.load %arg3[%c0_3, %c0_4] : memref<1x128xf32, #tpu.memory_space<vmem>>, vector<1x128xf32>
    %4 = vector.broadcast %3 : vector<1x128xf32> to vector<128x128xf32>
    %5 = arith.addf %2, %4 : vector<128x128xf32>
    %c0_5 = arith.constant 0 : index
    %c0_6 = arith.constant 0 : index
    %6 = vector.load %arg4[%c0_5, %c0_6] : memref<128x128xf32, #tpu.memory_space<vmem>>, vector<128x128xf32>
    tpu.vector_store %arg4[%c0_5, %c0_6], %5 {strides = array<i32>} : memref<128x128xf32, #tpu.memory_space<vmem>>, vector<128x128xf32>,
    return
  }
  func.func @transform_0(%arg0: i32) -> (i32, i32) {
    %c0_i32 = arith.constant 0 : i32
    %c0_i32_0 = arith.constant 0 : i32
    return %arg0, %c0_i32 : i32, i32
  }
  func.func @transform_1(%arg0: i32) -> (i32, i32) {
    %c0_i32 = arith.constant 0 : i32
    %c0_i32_0 = arith.constant 0 : i32
    %c0_i32_1 = arith.constant 0 : i32
    return %c0_i32, %c0_i32_0 : i32, i32
  }
  func.func @transform_2(%arg0: i32) -> (i32, i32) {
    %c0_i32 = arith.constant 0 : i32
    %c0_i32_0 = arith.constant 0 : i32
    %c0_i32_1 = arith.constant 0 : i32
    return %c0_i32, %c0_i32_0 : i32, i32
  }
  func.func @transform_3(%arg0: i32) -> (i32, i32) {
    %c0_i32 = arith.constant 0 : i32
    %c0_i32_0 = arith.constant 0 : i32
    return %arg0, %c0_i32 : i32, i32
  }
}

</mosaic_0001>

<llo_original>
// kernel: downsample_conv.1
$region0: #{downsample_conv.1}
  #allocation0 [shape = 'u32[]', space=smem, size = 0x4, offset = 0x4, fixed_abs, tag = 'smem constant byte address 0x4 - core index']
  #allocation1 [shape = 'u32[144,128]{1,0:T(1,128)}', space=vmem, size = 0x12000, scoped, tag = 'internal scratch']
  %s0 = inlined_call_operand.vmem [shape: bf16[128,36], index: 0, kind: input, shape index: {}]
  %s1 = inlined_call_operand.vmem [shape: bf16[36,128], index: 1, kind: input, shape index: {}]
  %s2 = inlined_call_operand.vmem [shape: f32[1,128], index: 2, kind: input, shape index: {}]
  %s3 = inlined_call_operand.vmem [shape: f32[128,128], index: 3, kind: output, shape index: {}]
  %s4 = sld [smem:[#allocation0]]
  $region22: #{downsample_conv.1} parent=0
    _
  %s6 = ssub.s32 1, %s4
  %s7 = scalar_select 0, %s6, %s4
  // Predicated region
  $region2: #{downsample_conv.1} parent=0 // pred_check
    _
  $region3: #{downsample_conv.1} parent=0 // pred_check_branch
    %9 = sbr.rel (0) target = $region5
  $region4: #{downsample_conv.1} parent=0 // pred_region
    _
  $region5: #{downsample_conv.1} parent=0 // pred_fallthru
    _
  // Predicated region
  $region6: #{downsample_conv.1} parent=0 // pred_check
    _
  $region7: #{downsample_conv.1} parent=0 // pred_check_branch
    %11 = sbr.rel (0) target = $region9
  $region8: #{downsample_conv.1} parent=0 // pred_region
    _
  $region9: #{downsample_conv.1} parent=0 // pred_fallthru
    _
  // Predicated region
  $region10: #{downsample_conv.1} parent=0 // pred_check
    _
  $region11: #{downsample_conv.1} parent=0 // pred_check_branch
    %13 = sbr.rel (0) target = $region13
  $region12: #{downsample_conv.1} parent=0 // pred_region
    _
  $region13: #{downsample_conv.1} parent=0 // pred_fallthru
    _
  %v15 = vld [vmem:[%s0] sm:$0xf]
  %v16 = vld [vmem:[%s0 + $0x4] sm:$0xf]
  %v17 = vld [vmem:[%s0 + $0x8] sm:$0xf]
  %v18 = vld [vmem:[%s0 + $0xc] sm:$0xf]
  %v19 = vld [vmem:[%s0 + $0x10] sm:$0xf]
  %v20 = vld [vmem:[%s0 + $0x14] sm:$0xf]
  %v21 = vld [vmem:[%s0 + $0x18] sm:$0xf]
  %v22 = vld [vmem:[%s0 + $0x1c] sm:$0xf]
  %v23 = vld [vmem:[%s0 + $0x20] sm:$0xf]
  %v24 = vld [vmem:[%s0 + $0x24] sm:$0xf]
  %v25 = vld [vmem:[%s0 + $0x28] sm:$0xf]
  %v26 = vld [vmem:[%s0 + $0x2c] sm:$0xf]
  %v27 = vld [vmem:[%s0 + $0x30] sm:$0xf]
  %v28 = vld [vmem:[%s0 + $0x34] sm:$0xf]
  %v29 = vld [vmem:[%s0 + $0x38] sm:$0xf]
  %v30 = vld [vmem:[%s0 + $0x3c] sm:$0xf]
  %v31 = vld [vmem:[%s1] sm:$0xf]
  %v32 = vld [vmem:[%s1 + $0x4] sm:$0xf]
  %v33 = vld [vmem:[%s1 + $0x8] sm:$0xf]
  %v34 = vld [vmem:[%s1 + $0xc] sm:$0xf]
  %v35 = vld [vmem:[%s1 + $0x10] sm:$0x3]
  %v36 = vld [vmem:[%s2] sm:$0x1]
  %v38 = vlaneseq
  %v39 = vshrl.u32 %v38, 7
  %v40 = vsub.s32 0, %v39
  %v41 = vrot.slane %v36, %v40
  %v59 = vunpack.c.l.b16 %v15
  %v60 = vunpack.c.l.b16 %v16
  %v61 = vunpack.c.l.b16 %v17
  %v62 = vunpack.c.l.b16 %v18
  %v63 = vunpack.c.l.b16 %v19
  %v64 = vunpack.c.l.b16 %v20
  %v65 = vunpack.c.l.b16 %v21
  %v66 = vunpack.c.l.b16 %v22
  %v67 = vunpack.c.l.b16 %v23
  %v68 = vunpack.c.l.b16 %v24
  %v69 = vunpack.c.l.b16 %v25
  %v70 = vunpack.c.l.b16 %v26
  %v71 = vunpack.c.l.b16 %v27
  %v72 = vunpack.c.l.b16 %v28
  %v73 = vunpack.c.l.b16 %v29
  %v74 = vunpack.c.l.b16 %v30
  %v75 = vpack.c.b16 %v60, %v59
  %v76 = vpack.c.b16 %v62, %v61
  %v77 = vpack.c.b16 %v64, %v63
  %v78 = vpack.c.b16 %v66, %v65
  %v79 = vpack.c.b16 %v68, %v67
  %v80 = vpack.c.b16 %v70, %v69
  %v81 = vpack.c.b16 %v72, %v71
  %v82 = vpack.c.b16 %v74, %v73
  %v88 = vunpack.c.l.b16 %v31
  %v89 = vunpack.c.l.b16 %v32
  %v90 = vunpack.c.l.b16 %v33
  %v91 = vunpack.c.l.b16 %v34
  %v92 = vunpack.c.l.b16 %v35
  %v93 = vpack.c.b16 %v89, %v88
  %v94 = vpack.c.b16 %v91, %v90
  %v95 = vpack.c.b16 %v92, %v92
  %vm98 = vcmask 293888
  %v100 = vsel %vm98, %v75, 0
  %v103 = vsel %vm98, %v76, 0
  %v106 = vsel %vm98, %v77, 0
  %v109 = vsel %vm98, %v78, 0
  %v112 = vsel %vm98, %v79, 0
  %v115 = vsel %vm98, %v80, 0
  %v118 = vsel %vm98, %v81, 0
  %v121 = vsel %vm98, %v82, 0
  %vm123 = vcmask 1041408
  %v125 = vsel %vm123, %v95, 0
  %127 = vmatprep.subr.bf16.mxu0 0
  %128 = vmatpush1.bf16.msra.mxu0 0
  %129 = vmatprep.subr.bf16.mxu0 0
  %130 = vmatpush1.bf16.msra.mxu0 0
  %131 = vmatprep.subr.bf16.mxu0 0
  %132 = vmatpush1.bf16.msra.mxu0 0
  %133 = vmatprep.subr.bf16.mxu0 0
  %134 = vmatpush1.bf16.msra.mxu0 0
  %135 = vmatprep.subr.bf16.mxu0 0
  %136 = vmatpush1.bf16.msra.mxu0 0
  %137 = vmatprep.subr.bf16.mxu0 0
  %138 = vmatpush1.bf16.msra.mxu0 %v125
  %139 = vmatprep.subr.bf16.mxu0 0
  %140 = vmatpush1.bf16.msra.mxu0 %v94
  %141 = vmatprep.subr.bf16.mxu0 0
  %142 = vmatpush1.bf16.msra.mxu0 %v93
  %143 = vmatprep.subr.bf16.mxu0 0
  %144 = vmatpush2.bf16.msra.mxu0 0
  %145 = vmatprep.subr.bf16.mxu0 0
  %146 = vmatpush2.bf16.msra.mxu0 0
  %147 = vmatprep.subr.bf16.mxu0 0
  %148 = vmatpush2.bf16.msra.mxu0 0
  %149 = vmatprep.subr.bf16.mxu0 0
  %150 = vmatpush2.bf16.msra.mxu0 0
  %151 = vmatprep.subr.bf16.mxu0 0
  %152 = vmatpush2.bf16.msra.mxu0 0
  %153 = vmatprep.subr.bf16.mxu0 0
  %154 = vmatpush2.bf16.msra.mxu0 0
  %155 = vmatprep.subr.bf16.mxu0 0
  %156 = vmatpush2.bf16.msra.mxu0 0
  %157 = vmatprep.subr.bf16.mxu0 0
  %158 = vmatpush2.bf16.msra.mxu0 0
  %159 = vmatprep.mubr.bf16.mxu0 0
  %160 = vmatmul.mubr.bf16.gmra.mxu0 %v100
  %v161 = vpop.f32.mrf.mxu0
  %v162 = vadd.f32 %v41, %v161
  %v163 = vpop.f32.mrf.mxu0
  %v164 = vpop.f32.mrf.mxu0
  %v165 = vadd.f32 %v41, %v164
  %v166 = vpop.f32.mrf.mxu0
  %167 = vmatprep.mubr.bf16.mxu0 0
  %168 = vmatmul.mubr.bf16.gmra.mxu0 %v103
  %v169 = vpop.f32.mrf.mxu0
  %v170 = vadd.f32 %v41, %v169
  %v171 = vpop.f32.mrf.mxu0
  %v172 = vpop.f32.mrf.mxu0
  %v173 = vadd.f32 %v41, %v172
  %v174 = vpop.f32.mrf.mxu0
  %175 = vmatprep.mubr.bf16.mxu0 0
  %176 = vmatmul.mubr.bf16.gmra.mxu0 %v106
  %v177 = vpop.f32.mrf.mxu0
  %v178 = vadd.f32 %v41, %v177
  %v179 = vpop.f32.mrf.mxu0
  %v180 = vpop.f32.mrf.mxu0
  %v181 = vadd.f32 %v41, %v180
  %v182 = vpop.f32.mrf.mxu0
  %183 = vmatprep.mubr.bf16.mxu0 0
  %184 = vmatmul.mubr.bf16.gmra.mxu0 %v109
  %v185 = vpop.f32.mrf.mxu0
  %v186 = vadd.f32 %v41, %v185
  %v187 = vpop.f32.mrf.mxu0
  %v188 = vpop.f32.mrf.mxu0
  %v189 = vadd.f32 %v41, %v188
  %v190 = vpop.f32.mrf.mxu0
  %191 = vmatprep.mubr.bf16.mxu0 0
  %192 = vmatmul.mubr.bf16.gmra.mxu0 %v112
  %v193 = vpop.f32.mrf.mxu0
  %v194 = vadd.f32 %v41, %v193
  %v195 = vpop.f32.mrf.mxu0
  %v196 = vpop.f32.mrf.mxu0
  %v197 = vadd.f32 %v41, %v196
  %v198 = vpop.f32.mrf.mxu0
  %199 = vmatprep.mubr.bf16.mxu0 0
  %200 = vmatmul.mubr.bf16.gmra.mxu0 %v115
  %v201 = vpop.f32.mrf.mxu0
  %v202 = vadd.f32 %v41, %v201
  %v203 = vpop.f32.mrf.mxu0
  %v204 = vpop.f32.mrf.mxu0
  %v205 = vadd.f32 %v41, %v204
  %v206 = vpop.f32.mrf.mxu0
  %207 = vmatprep.mubr.bf16.mxu0 0
  %208 = vmatmul.mubr.bf16.gmra.mxu0 %v118
  %v209 = vpop.f32.mrf.mxu0
  %v210 = vadd.f32 %v41, %v209
  %v211 = vpop.f32.mrf.mxu0
  %v212 = vpop.f32.mrf.mxu0
  %v213 = vadd.f32 %v41, %v212
  %v214 = vpop.f32.mrf.mxu0
  %215 = vmatprep.mubr.bf16.mxu0 0
  %216 = vmatmul.mubr.bf16.gmra.mxu0 %v121
  %v217 = vpop.f32.mrf.mxu0
  %v218 = vadd.f32 %v41, %v217
  %v219 = vpop.f32.mrf.mxu0
  %v220 = vpop.f32.mrf.mxu0
  %v221 = vadd.f32 %v41, %v220
  %v222 = vpop.f32.mrf.mxu0
  %223 = vdwg.mxu0
  %224 = vst [vmem:[%s3] sm:$0xff] %v162
  %225 = vst [vmem:[%s3 + $0x8] sm:$0xff] %v165
  %226 = vst [vmem:[%s3 + $0x10] sm:$0xff] %v170
  %227 = vst [vmem:[%s3 + $0x18] sm:$0xff] %v173
  %228 = vst [vmem:[%s3 + $0x20] sm:$0xff] %v178
  %229 = vst [vmem:[%s3 + $0x28] sm:$0xff] %v181
  %230 = vst [vmem:[%s3 + $0x30] sm:$0xff] %v186
  %231 = vst [vmem:[%s3 + $0x38] sm:$0xff] %v189
  %232 = vst [vmem:[%s3 + $0x40] sm:$0xff] %v194
  %233 = vst [vmem:[%s3 + $0x48] sm:$0xff] %v197
  %234 = vst [vmem:[%s3 + $0x50] sm:$0xff] %v202
  %235 = vst [vmem:[%s3 + $0x58] sm:$0xff] %v205
  %236 = vst [vmem:[%s3 + $0x60] sm:$0xff] %v210
  %237 = vst [vmem:[%s3 + $0x68] sm:$0xff] %v213
  %238 = vst [vmem:[%s3 + $0x70] sm:$0xff] %v218
  %239 = vst [vmem:[%s3 + $0x78] sm:$0xff] %v221
  // Predicated region
  $region14: #{downsample_conv.1} parent=0 // pred_check
    _
  $region15: #{downsample_conv.1} parent=0 // pred_check_branch
    %241 = sbr.rel (0) target = $region17
  $region16: #{downsample_conv.1} parent=0 // pred_region
    _
  $region17: #{downsample_conv.1} parent=0 // pred_fallthru
    _
  // Predicated region
  $region18: #{downsample_conv.1} parent=0 // pred_check
    _
  $region19: #{downsample_conv.1} parent=0 // pred_check_branch
    %243 = sbr.rel (0) target = $region21
  $region20: #{downsample_conv.1} parent=0 // pred_region
    _
  $region21: #{downsample_conv.1} parent=0 // pred_fallthru
    _

</llo_original>
